<compile_context>
chip_gen: v7x
topology: tpu7x:2x2x1
jax: 0.10.0
libtpu: 0.0.40
codegen_flags: <defaults>
</compile_context>

<pallas_src>
import functools

import numpy as np
import jax
import jax.numpy as jnp
from jax import lax
from jax.experimental import pallas as pl
from jax.experimental.pallas import tpu as pltpu


# ----------------------------------------------------------------------------
# Small helpers
# ----------------------------------------------------------------------------
def _round_up(x, m):
    return ((x + m - 1) // m) * m


def _pad_rows(x, mult):
    b = x.shape[0]
    bp = _round_up(b, mult)
    if bp != b:
        x = jnp.pad(x, ((0, bp - b), (0, 0)))
    return x, b


def _pad_cols(x, mult):
    c = x.shape[1]
    cp = _round_up(c, mult)
    if cp != c:
        x = jnp.pad(x, ((0, 0), (0, cp - c)))
    return x


def _tpu_vmem_bytes():
    try:
        return int(pltpu.get_tpu_info().vmem_capacity_bytes)
    except Exception:
        return 64 << 20          # conservative default (v7x-sized VMEM)


def _vmem_limit_bytes():
    cap = _tpu_vmem_bytes()
    return int(min(cap - (16 << 20), 100 << 20))


def _pick_tiling(bp):
    """Pick a batch tile (multiple of 8) and padded batch for the 1-D grid."""
    vmem = _tpu_vmem_bytes()
    if vmem <= (64 << 20):
        # v7x: 64 MiB VMEM, 2 TensorCores per chip.  Cap the tile at 128 rows
        # and split moderate batches into >= 2 grid steps so the "parallel"
        # grid axis actually spans both cores.
        if bp >= 32:
            tb = min(128, _round_up(pl.cdiv(bp, 2), 8))
        else:
            tb = min(128, bp)
    else:
        # v5e / v6e: single TC, 128 MiB physical VMEM -> larger tiles amortize
        # the ~0.35 us per-step overhead.
        tb = min(256, bp)
    tb = max(tb, 8)
    return tb, _round_up(bp, tb)


# ----------------------------------------------------------------------------
# Pallas kernels
# ----------------------------------------------------------------------------
def _select_kernel(q_ref, kn_ref, pk_ref, pv_ref, *out_refs, emit_cos, pool):
    """Normalize query, cosine-sim vs pre-normalized keys, top-1 gather."""
    if emit_cos:
        cos_ref, idx_ref, ek_ref, ev_ref = out_refs
    else:
        ek_ref, ev_ref = out_refs

    q = q_ref[...]                                  # (tb, kd_pad)  f32
    # q / max(||q||, eps)  ==  q * rsqrt(max(sum(q^2), eps^2)); rsqrt -> EUP.
    ssq = jnp.sum(q * q, axis=1, keepdims=True)
    qn = (q * lax.rsqrt(jnp.maximum(ssq, jnp.float32(1e-24)))).astype(jnp.bfloat16)

    # cosine similarity: bf16 x bf16 on the MXU, f32 accumulation.
    cos = lax.dot_general(
        qn, kn_ref[...],                            # (pool_pad, kd_pad) bf16
        dimension_numbers=(((1,), (1,)), ((), ())),
        preferred_element_type=jnp.float32,
    )                                               # (tb, pool_pad) f32

    if emit_cos:
        cos_ref[...] = cos                          # lane-dense (128-wide) store

    pool_pad = cos.shape[1]
    col = lax.broadcasted_iota(jnp.int32, cos.shape, 1)
    # Mask the zero-padded pool columns so they can never win the top-1.
    cos_m = jnp.where(col < pool, cos, jnp.float32(-1e30))
    max_val = jnp.max(cos_m, axis=1, keepdims=True)
    # first-max tie-break (like torch.topk k=1); exact equality is safe because
    # max_val is derived from the same array.
    idx = jnp.min(jnp.where(cos_m == max_val, col, pool_pad),
                  axis=1, keepdims=True)            # (tb, 1) int32
    if emit_cos:
        idx_ref[...] = idx

    one_hot = (col == idx).astype(jnp.bfloat16)     # (tb, pool_pad)

    # P_ = p[k_idx]  ==  one_hot @ p_half  (two lane-dense bf16 outputs).
    ek_ref[...] = jnp.dot(one_hot, pk_ref[...],
                          preferred_element_type=jnp.float32).astype(ek_ref.dtype)
    ev_ref[...] = jnp.dot(one_hot, pv_ref[...],
                          preferred_element_type=jnp.float32).astype(ev_ref.dtype)


def _cos_kernel(q_ref, kn_ref, cos_ref):
    """Cosine similarities only (task-id-bootstrap training path, no gather)."""
    q = q_ref[...]
    ssq = jnp.sum(q * q, axis=1, keepdims=True)
    qn = (q * lax.rsqrt(jnp.maximum(ssq, jnp.float32(1e-24)))).astype(jnp.bfloat16)
    cos_ref[...] = lax.dot_general(
        qn, kn_ref[...],
        dimension_numbers=(((1,), (1,)), ((), ())),
        preferred_element_type=jnp.float32,
    )


# ----------------------------------------------------------------------------
# Wrappers around pallas_call
# ----------------------------------------------------------------------------
def prompt_select(x_querry, Kn, pk_flat, pv_flat, *, pool, emit_cos):
    """Returns (cos_pad?, idx?, Ek_flat_bf16, Ev_flat_bf16) sliced to B rows."""
    pool_pad, kd_pad = Kn.shape
    flat_k = pk_flat.shape[1]
    flat_v = pv_flat.shape[1]

    xq = _pad_cols(x_querry.astype(jnp.float32), 128)   # lane-pad query cols
    xq, b0 = _pad_rows(xq, 8)
    bp = xq.shape[0]
    tb, bp2 = _pick_tiling(bp)
    if bp2 != bp:
        xq = jnp.pad(xq, ((0, bp2 - bp), (0, 0)))
        bp = bp2
    grid = (bp // tb,)

    # Constant-index-map inputs stay resident across grid steps; single-buffer
    # them so they don't pay a useless double-buffer VMEM cost.
    resident = dict(index_map=lambda i: (0, 0), pipeline_mode=pl.Buffered(1))
    in_specs = [
        pl.BlockSpec((tb, kd_pad), lambda i: (i, 0)),             # query tile
        pl.BlockSpec((pool_pad, kd_pad), **resident),             # keys
        pl.BlockSpec((pool_pad, flat_k), **resident),             # Ek half
        pl.BlockSpec((pool_pad, flat_v), **resident),             # Ev half
    ]

    out_shapes, out_specs = [], []
    if emit_cos:
        out_shapes += [jax.ShapeDtypeStruct((bp, pool_pad), jnp.float32),
                       jax.ShapeDtypeStruct((bp, 1), jnp.int32)]
        out_specs += [pl.BlockSpec((tb, pool_pad), lambda i: (i, 0)),
                      pl.BlockSpec((tb, 1), lambda i: (i, 0))]
    out_shapes += [jax.ShapeDtypeStruct((bp, flat_k), jnp.bfloat16),
                   jax.ShapeDtypeStruct((bp, flat_v), jnp.bfloat16)]
    out_specs += [pl.BlockSpec((tb, flat_k), lambda i: (i, 0)),
                  pl.BlockSpec((tb, flat_v), lambda i: (i, 0))]

    outs = pl.pallas_call(
        functools.partial(_select_kernel, emit_cos=emit_cos, pool=pool),
        out_shape=tuple(out_shapes),
        grid=grid,
        in_specs=in_specs,
        out_specs=tuple(out_specs),
        compiler_params=pltpu.CompilerParams(
            dimension_semantics=("parallel",),
            vmem_limit_bytes=_vmem_limit_bytes()),
    )(xq, Kn, pk_flat, pv_flat)

    return tuple(o[:b0] for o in outs)


def cosine_scores(x_querry, Kn):
    """Pallas call returning the (B, pool_pad) cosine-similarity matrix."""
    pool_pad, kd_pad = Kn.shape
    xq = _pad_cols(x_querry.astype(jnp.float32), 128)
    xq, b0 = _pad_rows(xq, 8)
    bp = xq.shape[0]
    tb, bp2 = _pick_tiling(bp)
    if bp2 != bp:
        xq = jnp.pad(xq, ((0, bp2 - bp), (0, 0)))
        bp = bp2
    grid = (bp // tb,)
    cos = pl.pallas_call(
        _cos_kernel,
        out_shape=jax.ShapeDtypeStruct((bp, pool_pad), jnp.float32),
        grid=grid,
        in_specs=[pl.BlockSpec((tb, kd_pad), lambda i: (i, 0)),
                  pl.BlockSpec((pool_pad, kd_pad), lambda i: (0, 0),
                               pipeline_mode=pl.Buffered(1))],
        out_specs=pl.BlockSpec((tb, pool_pad), lambda i: (i, 0)),
        compiler_params=pltpu.CompilerParams(
            dimension_semantics=("parallel",),
            vmem_limit_bytes=_vmem_limit_bytes()),
    )(xq, Kn)
    return cos[:b0]


# ----------------------------------------------------------------------------
# Jitted e-layer hot paths (kernel + reshape/loss glue fused into one program)
# ----------------------------------------------------------------------------
@functools.partial(jax.jit, static_argnames=("emb_d", "pool"))
def _e_select_eval(x_querry, Kn, pk_flat, pv_flat, *, emb_d, pool):
    ek_flat, ev_flat = prompt_select(x_querry, Kn, pk_flat, pv_flat,
                                     pool=pool, emit_cos=False)
    b = x_querry.shape[0]
    return ek_flat.reshape(b, -1, emb_d), ev_flat.reshape(b, -1, emb_d)


@functools.partial(jax.jit, static_argnames=("emb_d", "pool"))
def _e_select_train(x_querry, Kn, pk_flat, pv_flat, *, emb_d, pool):
    cos_pad, idx, ek_flat, ev_flat = prompt_select(
        x_querry, Kn, pk_flat, pv_flat, pool=pool, emit_cos=True)
    b = x_querry.shape[0]
    cos = cos_pad[:, :pool]
    # torch: k_idx = topk(cos, 1).indices  (shape (B,1));
    #        loss  = (1.0 - cos_sim[:, k_idx]).sum()  -> cross-indexed (B, B, 1)
    # idx is the kernel's own top-1 index (no redundant argmax here).
    loss = jnp.sum(1.0 - cos[:, idx])
    return (ek_flat.reshape(b, -1, emb_d),
            ev_flat.reshape(b, -1, emb_d),
            loss.astype(jnp.float32))


@functools.partial(jax.jit, static_argnames=("task_id", "i_half", "emb_d"))
def _e_bootstrap_train(x_querry, Kn, p_task, *, task_id, i_half, emb_d):
    cos = cosine_scores(x_querry, Kn)
    loss = jnp.sum(1.0 - cos[:, task_id]).astype(jnp.float32)
    b = x_querry.shape[0]
    P_ = jnp.broadcast_to(p_task[None], (b,) + p_task.shape)
    Ek = P_[:, :i_half, :].reshape(b, -1, emb_d)
    Ev = P_[:, i_half:, :].reshape(b, -1, emb_d)
    return Ek, Ev, loss


# ----------------------------------------------------------------------------
# DualPrompt module (JAX wrapper; parameters built deterministically in-script)
# ----------------------------------------------------------------------------
class DualPromptPallas:
    def __init__(self, emb_d, n_tasks, prompt_param, key_dim=32, seed=0):
        self.task_count = 0
        self.emb_d = emb_d
        self.key_d = key_dim
        self.n_tasks = n_tasks
        # _init_smart
        self.top_k = 1
        self.task_id_bootstrap = True
        self.g_layers = [0, 1]
        self.e_layers = [2, 3, 4]
        self.g_p_length = int(prompt_param[2])
        self.e_p_length = int(prompt_param[1])
        self.e_pool_size = int(prompt_param[0])

        kd_pad = _round_up(self.key_d, 128)
        pool_pad = _round_up(self.e_pool_size, 128)
        i_half = self.e_p_length // 2

        # deterministic "uniform_" init (matches nn.init.uniform_ default U(0,1))
        key = jax.random.PRNGKey(seed)
        self.params = {}
        for g in self.g_layers:
            key, sub = jax.random.split(key)
            self.params[f'g_p_{g}'] = jax.random.uniform(
                sub, (self.g_p_length, emb_d), dtype=jnp.float32)
        for e in self.e_layers:
            key, sub1 = jax.random.split(key)
            key, sub2 = jax.random.split(key)
            p = jax.random.uniform(
                sub1, (self.e_pool_size, self.e_p_length, emb_d),
                dtype=jnp.float32)
            k = jax.random.uniform(
                sub2, (self.e_pool_size, self.key_d), dtype=jnp.float32)
            self.params[f'e_p_{e}'] = p
            self.params[f'e_k_{e}'] = k
            # Hoisted kernel constants: L2-normalized keys, zero-padded to
            # (pool_pad, kd_pad), stored bf16; flattened prompt halves padded
            # to pool_pad rows, stored bf16.
            kn = k / jnp.maximum(jnp.linalg.norm(k, axis=1, keepdims=True), 1e-12)
            kn = jnp.pad(kn, ((0, pool_pad - self.e_pool_size),
                              (0, kd_pad - self.key_d)))
            self.params[f'e_kn_{e}'] = kn.astype(jnp.bfloat16)
            pk = p[:, :i_half, :].reshape(self.e_pool_size, i_half * emb_d)
            pv = p[:, i_half:, :].reshape(self.e_pool_size,
                                          (self.e_p_length - i_half) * emb_d)
            self.params[f'e_pk_{e}'] = jnp.pad(
                pk, ((0, pool_pad - self.e_pool_size), (0, 0))).astype(jnp.bfloat16)
            self.params[f'e_pv_{e}'] = jnp.pad(
                pv, ((0, pool_pad - self.e_pool_size), (0, 0))).astype(jnp.bfloat16)

    def process_task_count(self):
        self.task_count += 1

    def forward(self, x_querry, l, x_block, train=False, task_id=None):
        B = x_querry.shape[0]
        loss = jnp.float32(0.0) if train else 0
        e_valid = False
        g_valid = False
        Ek = Ev = Gk = Gv = None
        i_half = self.e_p_length // 2

        if l in self.e_layers:
            e_valid = True
            xq = x_querry.astype(jnp.float32)
            Kn = self.params[f'e_kn_{l}']
            if train and self.task_id_bootstrap:
                p_task = self.params[f'e_p_{l}'][task_id]        # (Lp, D)
                Ek, Ev, loss = _e_bootstrap_train(
                    xq, Kn, p_task, task_id=int(task_id),
                    i_half=i_half, emb_d=self.emb_d)
            elif train:
                Ek, Ev, loss = _e_select_train(
                    xq, Kn, self.params[f'e_pk_{l}'], self.params[f'e_pv_{l}'],
                    emb_d=self.emb_d, pool=self.e_pool_size)
            else:
                Ek, Ev = _e_select_eval(
                    xq, Kn, self.params[f'e_pk_{l}'], self.params[f'e_pv_{l}'],
                    emb_d=self.emb_d, pool=self.e_pool_size)

        if l in self.g_layers:
            g_valid = True
            j = self.g_p_length // 2
            gp = self.params[f'g_p_{l}']                          # (Lg, D)
            P_ = jnp.broadcast_to(gp[None, :, :],
                                  (B, self.g_p_length, self.emb_d))
            Gk = P_[:, :j, :]
            Gv = P_[:, j:, :]

        if e_valid and g_valid:
            p_return = [jnp.concatenate((Ek.astype(jnp.float32), Gk), axis=1),
                        jnp.concatenate((Ev.astype(jnp.float32), Gv), axis=1)]
        elif e_valid:
            p_return = [Ek, Ev]
        elif g_valid:
            p_return = [Gk, Gv]
            loss = jnp.float32(0.0) if train else 0
        else:
            p_return = None
            loss = jnp.float32(0.0) if train else 0

        if train:
            return p_return, loss, x_block
        else:
            return p_return, 0, x_block


# ----------------------------------------------------------------------------
if __name__ == "__main__":
    emb_d = 32
    key_d = 32
    n_tasks = 4
    prompt_param = [8, 8, 4]     # [e_pool_size, e_p_length, g_p_length]
    B = 2

    model = DualPromptPallas(emb_d, n_tasks, prompt_param, key_dim=key_d, seed=0)

    rng = jax.random.PRNGKey(0)
    k1, k2 = jax.random.split(rng)
    x_querry = jax.random.normal(k1, (B, key_d), dtype=jnp.float32)
    x_block = jax.random.normal(k2, (B, 8, emb_d), dtype=jnp.float32)

    def as_np(x):
        return np.asarray(jnp.asarray(x, dtype=jnp.float32))

    # pure-JAX reference (matches the kernel's bf16 matmul path)
    def ref_e(xq, K, p):
        qn = xq / jnp.maximum(jnp.linalg.norm(xq, axis=1, keepdims=True), 1e-12)
        Kn = K / jnp.maximum(jnp.linalg.norm(K, axis=1, keepdims=True), 1e-12)
        cos = jnp.dot(qn.astype(jnp.bfloat16), Kn.astype(jnp.bfloat16).T,
                      preferred_element_type=jnp.float32)
        idx = jnp.argmax(cos, axis=1)
        return cos, p[idx]

    i_half = model.e_p_length // 2

    # --- eval on an e-layer (normalize + bf16 cos sim + top-1 gather)
    p_ret, loss, xb = model.forward(x_querry, l=2, x_block=x_block, train=False)
    jax.block_until_ready(p_ret[0]); jax.block_until_ready(p_ret[1])

    cos_ref, P_ref = ref_e(x_querry, model.params['e_k_2'], model.params['e_p_2'])
    assert np.allclose(as_np(p_ret[0]), as_np(P_ref[:, :i_half, :]), atol=1e-2)
    assert np.allclose(as_np(p_ret[1]), as_np(P_ref[:, i_half:, :]), atol=1e-2)
    assert p_ret[0].shape == (B, model.top_k * i_half, emb_d)

    # --- train, non-bootstrap path (cos + idx outputs, cross-indexed loss)
    model.task_id_bootstrap = False
    t_ret, t_loss, _ = model.forward(x_querry, l=4, x_block=x_block, train=True)
    jax.block_until_ready(t_ret[0]); jax.block_until_ready(t_loss)
    cos4, P4_ref = ref_e(x_querry, model.params['e_k_4'], model.params['e_p_4'])
    k_idx = jnp.argmax(cos4, axis=1)[:, None]
    loss_ref = jnp.sum(1.0 - cos4[:, k_idx])
    assert np.allclose(as_np(t_loss), as_np(loss_ref), atol=3e-2)
    assert np.allclose(as_np(t_ret[0]), as_np(P4_ref[:, :i_half, :]), atol=1e-2)
    assert np.allclose(as_np(t_ret[1]), as_np(P4_ref[:, i_half:, :]), atol=1e-2)

    # --- train, task-id-bootstrap path (cos-only kernel) and g-layer broadcast
    model.task_id_bootstrap = True
    b_ret, b_loss, _ = model.forward(x_querry, l=3, x_block=x_block,
                                     train=True, task_id=1)
    jax.block_until_ready(b_ret[0]); jax.block_until_ready(b_loss)
    cos3, _ = ref_e(x_querry, model.params['e_k_3'], model.params['e_p_3'])
    loss_ref3 = jnp.sum(1.0 - cos3[:, 1])
    assert np.allclose(as_np(b_loss), as_np(loss_ref3), atol=3e-2)
    assert np.allclose(as_np(b_ret[0]),
                       as_np(model.params['e_p_3'][1][:i_half]), atol=1e-5)

    g_ret, _, _ = model.forward(x_querry, l=0, x_block=x_block, train=False)
    jax.block_until_ready(g_ret[0])
    assert g_ret[0].shape == (B, model.g_p_length // 2, emb_d)

    print("KERNEL_OK")
</pallas_src>

<mosaic_0001>
module attributes {stable_mosaic.version = 11 : i64} {
  func.func @_select_kernel(%arg0: i32, %arg1: memref<8x128xf32, #tpu.memory_space<vmem>>, %arg2: memref<128x128xbf16, #tpu.memory_space<vmem>>, %arg3: memref<128x128xbf16, #tpu.memory_space<vmem>>, %arg4: memref<128x128xbf16, #tpu.memory_space<vmem>>, %arg5: memref<8x128xbf16, #tpu.memory_space<vmem>>, %arg6: memref<8x128xbf16, #tpu.memory_space<vmem>>) attributes {dimension_semantics = [#tpu.dimension_semantics<parallel>], iteration_bounds = array<i64: 1>, scalar_prefetch = 0 : i64, scratch_operands = 0 : i64, tpu.core_type = #tpu.core_type<tc>, window_params = [{transform_indices = @transform_0, window_bounds = array<i64: 8, 128>}, {pipeline_mode = #tpu.pipeline_mode<synchronous>, transform_indices = @transform_1, window_bounds = array<i64: 128, 128>}, {pipeline_mode = #tpu.pipeline_mode<synchronous>, transform_indices = @transform_2, window_bounds = array<i64: 128, 128>}, {pipeline_mode = #tpu.pipeline_mode<synchronous>, transform_indices = @transform_3, window_bounds = array<i64: 128, 128>}, {transform_indices = @transform_4, window_bounds = array<i64: 8, 128>}, {transform_indices = @transform_5, window_bounds = array<i64: 8, 128>}]} {
    %c0 = arith.constant 0 : index
    %c0_0 = arith.constant 0 : index
    %0 = vector.load %arg1[%c0, %c0_0] : memref<8x128xf32, #tpu.memory_space<vmem>>, vector<8x128xf32>
    %1 = arith.mulf %0, %0 : vector<8x128xf32>
    %cst = arith.constant dense<0.000000e+00> : vector<8xf32>
    %2 = vector.multi_reduction <add>, %1, %cst [1] : vector<8x128xf32> to vector<8xf32>
    %3 = vector.shape_cast %2 : vector<8xf32> to vector<8x1xf32>
    %cst_1 = arith.constant 1.000000e-24 : f32
    %4 = vector.broadcast %cst_1 : f32 to vector<8x1xf32>
    %5 = arith.maximumf %3, %4 : vector<8x1xf32>
    %6 = math.rsqrt %5 : vector<8x1xf32>
    %7 = vector.broadcast %6 : vector<8x1xf32> to vector<8x128xf32>
    %8 = arith.mulf %0, %7 : vector<8x128xf32>
    %9 = arith.truncf %8 : vector<8x128xf32> to vector<8x128xbf16>
    %c0_2 = arith.constant 0 : index
    %c0_3 = arith.constant 0 : index
    %10 = vector.load %arg2[%c0_2, %c0_3] : memref<128x128xbf16, #tpu.memory_space<vmem>>, vector<128x128xbf16>
    %cst_4 = arith.constant dense<0.000000e+00> : vector<8x128xf32>
    %11 = tpu.matmul %9, %10, %cst_4 {dimension_numbers = #tpu.dot_dimension_numbers<[1], [1], [0], [0], [0, 0, 1, 0], [], []>} : vector<8x128xbf16>, vector<128x128xbf16>, vector<8x128xf32> -> vector<8x128xf32>
    %12 = tpu.iota {dimensions = array<i32: 1>} : vector<8x128xi32>
    %c8_i32 = arith.constant 8 : i32
    %13 = vector.broadcast %c8_i32 : i32 to vector<8x128xi32>
    %14 = arith.cmpi slt, %12, %13 : vector<8x128xi32>
    %cst_5 = arith.constant -1.000000e+30 : f32
    %15 = vector.broadcast %cst_5 : f32 to vector<8x128xf32>
    %16 = arith.select %14, %11, %15 : vector<8x128xi1>, vector<8x128xf32>
    %cst_6 = arith.constant dense<0xFF800000> : vector<8xf32>
    %17 = vector.multi_reduction <maximumf>, %16, %cst_6 [1] : vector<8x128xf32> to vector<8xf32>
    %18 = vector.shape_cast %17 : vector<8xf32> to vector<8x1xf32>
    %19 = vector.broadcast %18 : vector<8x1xf32> to vector<8x128xf32>
    %20 = arith.cmpf oeq, %16, %19 : vector<8x128xf32>
    %c128_i32 = arith.constant 128 : i32
    %21 = vector.broadcast %c128_i32 : i32 to vector<8x128xi32>
    %22 = arith.select %20, %12, %21 : vector<8x128xi1>, vector<8x128xi32>
    %cst_7 = arith.constant dense<2147483647> : vector<8xi32>
    %23 = vector.multi_reduction <minsi>, %22, %cst_7 [1] : vector<8x128xi32> to vector<8xi32>
    %24 = vector.shape_cast %23 : vector<8xi32> to vector<8x1xi32>
    %25 = vector.broadcast %24 : vector<8x1xi32> to vector<8x128xi32>
    %26 = arith.cmpi eq, %12, %25 : vector<8x128xi32>
    %27 = arith.extui %26 : vector<8x128xi1> to vector<8x128xi32>
    %28 = arith.sitofp %27 : vector<8x128xi32> to vector<8x128xf32>
    %29 = arith.truncf %28 : vector<8x128xf32> to vector<8x128xbf16>
    %c0_8 = arith.constant 0 : index
    %c0_9 = arith.constant 0 : index
    %30 = vector.load %arg3[%c0_8, %c0_9] : memref<128x128xbf16, #tpu.memory_space<vmem>>, vector<128x128xbf16>
    %cst_10 = arith.constant dense<0.000000e+00> : vector<8x128xf32>
    %31 = tpu.matmul %29, %30, %cst_10 {dimension_numbers = #tpu.dot_dimension_numbers<[1], [0], [0], [1], [0, 0, 1, 1], [], []>} : vector<8x128xbf16>, vector<128x128xbf16>, vector<8x128xf32> -> vector<8x128xf32>
    %32 = arith.truncf %31 : vector<8x128xf32> to vector<8x128xbf16>
    %c0_11 = arith.constant 0 : index
    %c0_12 = arith.constant 0 : index
    %33 = vector.load %arg5[%c0_11, %c0_12] : memref<8x128xbf16, #tpu.memory_space<vmem>>, vector<8x128xbf16>
    tpu.vector_store %arg5[%c0_11, %c0_12], %32 {strides = array<i32>} : memref<8x128xbf16, #tpu.memory_space<vmem>>, vector<8x128xbf16>,
    %c0_13 = arith.constant 0 : index
    %c0_14 = arith.constant 0 : index
    %34 = vector.load %arg4[%c0_13, %c0_14] : memref<128x128xbf16, #tpu.memory_space<vmem>>, vector<128x128xbf16>
    %cst_15 = arith.constant dense<0.000000e+00> : vector<8x128xf32>
    %35 = tpu.matmul %29, %34, %cst_15 {dimension_numbers = #tpu.dot_dimension_numbers<[1], [0], [0], [1], [0, 0, 1, 1], [], []>} : vector<8x128xbf16>, vector<128x128xbf16>, vector<8x128xf32> -> vector<8x128xf32>
    %36 = arith.truncf %35 : vector<8x128xf32> to vector<8x128xbf16>
    %c0_16 = arith.constant 0 : index
    %c0_17 = arith.constant 0 : index
    %37 = vector.load %arg6[%c0_16, %c0_17] : memref<8x128xbf16, #tpu.memory_space<vmem>>, vector<8x128xbf16>
    tpu.vector_store %arg6[%c0_16, %c0_17], %36 {strides = array<i32>} : memref<8x128xbf16, #tpu.memory_space<vmem>>, vector<8x128xbf16>,
    return
  }
  func.func @transform_0(%arg0: i32) -> (i32, i32) {
    %c0_i32 = arith.constant 0 : i32
    %c0_i32_0 = arith.constant 0 : i32
    return %arg0, %c0_i32 : i32, i32
  }
  func.func @transform_1(%arg0: i32) -> (i32, i32) {
    %c0_i32 = arith.constant 0 : i32
    %c0_i32_0 = arith.constant 0 : i32
    %c0_i32_1 = arith.constant 0 : i32
    return %c0_i32, %c0_i32_0 : i32, i32
  }
  func.func @transform_2(%arg0: i32) -> (i32, i32) {
    %c0_i32 = arith.constant 0 : i32
    %c0_i32_0 = arith.constant 0 : i32
    %c0_i32_1 = arith.constant 0 : i32
    return %c0_i32, %c0_i32_0 : i32, i32
  }
  func.func @transform_3(%arg0: i32) -> (i32, i32) {
    %c0_i32 = arith.constant 0 : i32
    %c0_i32_0 = arith.constant 0 : i32
    %c0_i32_1 = arith.constant 0 : i32
    return %c0_i32, %c0_i32_0 : i32, i32
  }
  func.func @transform_4(%arg0: i32) -> (i32, i32) {
    %c0_i32 = arith.constant 0 : i32
    %c0_i32_0 = arith.constant 0 : i32
    return %arg0, %c0_i32 : i32, i32
  }
  func.func @transform_5(%arg0: i32) -> (i32, i32) {
    %c0_i32 = arith.constant 0 : i32
    %c0_i32_0 = arith.constant 0 : i32
    return %arg0, %c0_i32 : i32, i32
  }
}

</mosaic_0001>

<llo_original>
// kernel: _e_select_eval.1
$region0: #{_e_select_eval.1}
  #allocation0 [shape = 'u32[]', space=smem, size = 0x4, offset = 0x4, fixed_abs, tag = 'smem constant byte address 0x4 - core index']
  #allocation1 [shape = 'u32[144,128]{1,0:T(1,128)}', space=vmem, size = 0x12000, scoped, tag = 'internal scratch']
  %s0 = inlined_call_operand.vmem [shape: f32[8,128], index: 0, kind: input, shape index: {}]
  %s1 = inlined_call_operand.hbm [shape: bf16[128,128], index: 1, kind: input, shape index: {}]
  %s2 = inlined_call_operand.hbm [shape: bf16[128,128], index: 2, kind: input, shape index: {}]
  %s3 = inlined_call_operand.hbm [shape: bf16[128,128], index: 3, kind: input, shape index: {}]
  %s4 = inlined_call_operand.vmem [shape: bf16[8,128], index: 4, kind: output, shape index: {0}]
  %s5 = inlined_call_operand.vmem [shape: bf16[8,128], index: 5, kind: output, shape index: {1}]
  %6 = xla_tuple %s4, %s5
  %s7 = sld [smem:[#allocation0]]
  $region46: #{_e_select_eval.1} parent=0
    _
  %s9 = ssub.s32 1, %s7
  %s10 = scalar_select 0, %s9, %s7
  $region1: #{_e_select_eval.1} parent=0
    #allocation2 [shape = 'u8[32768]{0}', space=vmem, size = 0x8000, scoped, tag = 'input window, operand 1, single buffered']
    #allocation3 [shape = 's32[1]{0}', space=sflag, size = 0x4, scoped, tag = 'scoped memory for _e_select_eval.1']
    #allocation4 [shape = 'u8[32768]{0}', space=vmem, size = 0x8000, scoped, tag = 'input window, operand 2, single buffered']
    #allocation5 [shape = 's32[1]{0}', space=sflag, size = 0x4, scoped, tag = 'scoped memory for _e_select_eval.1']
    #allocation6 [shape = 'u8[32768]{0}', space=vmem, size = 0x8000, scoped, tag = 'input window, operand 3, single buffered']
    %11 = vsyncpa [#allocation3], 0
    %12 = vsyncpa [#allocation5], 0
    // Predicated region
    $region2: #{_e_select_eval.1} parent=1 // pred_check
      _
    $region3: #{_e_select_eval.1} parent=1 // pred_check_branch
      %14 = sbr.rel (0) target = $region5
    $region4: #{_e_select_eval.1} parent=1 // pred_region
      _
    $region5: #{_e_select_eval.1} parent=1 // pred_fallthru
      _
    // Predicated region
    $region6: #{_e_select_eval.1} parent=1 // pred_check
      _
    $region7: #{_e_select_eval.1} parent=1 // pred_check_branch
      %16 = sbr.rel (0) target = $region9
    $region8: #{_e_select_eval.1} parent=1 // pred_region
      %s18 = ssub.s32 1024, 1024
      %19 = vsyncadd [#allocation3], %s18
      %s20 = sshll.u32 [#allocation2], 4
      %s21 = int_to_ptr.vmem [resolvable:$true] %s20
      %26 = dma.hbm_to_vmem [thread:$0]  %s1, 1024, %s21, [#allocation3], 64, 64, 4
    $region9: #{_e_select_eval.1} parent=1 // pred_fallthru
      _
    // Predicated region
    $region10: #{_e_select_eval.1} parent=1 // pred_check
      _
    $region11: #{_e_select_eval.1} parent=1 // pred_check_branch
      %28 = sbr.rel (0) target = $region13
    $region12: #{_e_select_eval.1} parent=1 // pred_region
      %s30 = ssub.s32 1024, 1024
      %31 = vsyncadd [#allocation5], %s30
      %s32 = sshll.u32 [#allocation4], 4
      %s33 = int_to_ptr.vmem [resolvable:$true] %s32
      %38 = dma.hbm_to_vmem [thread:$0]  %s2, 1024, %s33, [#allocation5], 64, 64, 4
    $region13: #{_e_select_eval.1} parent=1 // pred_fallthru
      _
    // Predicated region
    $region14: #{_e_select_eval.1} parent=1 // pred_check
      _
    $region15: #{_e_select_eval.1} parent=1 // pred_check_branch
      %40 = sbr.rel (0) target = $region17
    $region16: #{_e_select_eval.1} parent=1 // pred_region
      %s42 = ssub.s32 1024, 1024
      %43 = vsyncadd [#allocation5], %s42
      %s44 = sshll.u32 [#allocation6], 4
      %s45 = int_to_ptr.vmem [resolvable:$true] %s44
      %50 = dma.hbm_to_vmem [thread:$0]  %s3, 1024, %s45, [#allocation5], 64, 64, 4
    $region17: #{_e_select_eval.1} parent=1 // pred_fallthru
      _
    // Predicated region
    $region18: #{_e_select_eval.1} parent=1 // pred_check
      _
    $region19: #{_e_select_eval.1} parent=1 // pred_check_branch
      %52 = sbr.rel (0) target = $region21
    $region20: #{_e_select_eval.1} parent=1 // pred_region
      %53 = dma.done [#allocation3], 1024
    $region21: #{_e_select_eval.1} parent=1 // pred_fallthru
      _
    // Predicated region
    $region22: #{_e_select_eval.1} parent=1 // pred_check
      _
    $region23: #{_e_select_eval.1} parent=1 // pred_check_branch
      %55 = sbr.rel (0) target = $region25
    $region24: #{_e_select_eval.1} parent=1 // pred_region
      %56 = dma.done [#allocation5], 1024
    $region25: #{_e_select_eval.1} parent=1 // pred_fallthru
      _
    // Predicated region
    $region26: #{_e_select_eval.1} parent=1 // pred_check
      _
    $region27: #{_e_select_eval.1} parent=1 // pred_check_branch
      %58 = sbr.rel (0) target = $region29
    $region28: #{_e_select_eval.1} parent=1 // pred_region
      %59 = dma.done [#allocation5], 1024
    $region29: #{_e_select_eval.1} parent=1 // pred_fallthru
      _
    %v61 = vld [vmem:[%s0] sm:$0xff]
    %v62 = vmul.f32 %v61, %v61
    %63 = vadd.xlane.f32.xlu0 %v62
    %v64 = vpop.xlane.xlu0 %63
    %v65 = vmax.f32 %v64, 1e-24
    %v66 = vrsqrt.pop %v65
    %v67 = vmul.f32 %v61, %v66
    %v68 = vpack.c.bf16 %v67, %v67
    %v69 = vld [vmem:[#allocation2] sm:$0xf]
    %v70 = vld [vmem:[#allocation2 + $0x4] sm:$0xf]
    %v71 = vld [vmem:[#allocation2 + $0x8] sm:$0xf]
    %v72 = vld [vmem:[#allocation2 + $0xc] sm:$0xf]
    %v73 = vld [vmem:[#allocation2 + $0x10] sm:$0xf]
    %v74 = vld [vmem:[#allocation2 + $0x14] sm:$0xf]
    %v75 = vld [vmem:[#allocation2 + $0x18] sm:$0xf]
    %v76 = vld [vmem:[#allocation2 + $0x1c] sm:$0xf]
    %v77 = vld [vmem:[#allocation2 + $0x20] sm:$0xf]
    %v78 = vld [vmem:[#allocation2 + $0x24] sm:$0xf]
    %v79 = vld [vmem:[#allocation2 + $0x28] sm:$0xf]
    %v80 = vld [vmem:[#allocation2 + $0x2c] sm:$0xf]
    %v81 = vld [vmem:[#allocation2 + $0x30] sm:$0xf]
    %v82 = vld [vmem:[#allocation2 + $0x34] sm:$0xf]
    %v83 = vld [vmem:[#allocation2 + $0x38] sm:$0xf]
    %v84 = vld [vmem:[#allocation2 + $0x3c] sm:$0xf]
    %v101 = vunpack.c.l.b16 %v69
    %v102 = vunpack.c.l.b16 %v70
    %v103 = vunpack.c.l.b16 %v71
    %v104 = vunpack.c.l.b16 %v72
    %v105 = vunpack.c.l.b16 %v73
    %v106 = vunpack.c.l.b16 %v74
    %v107 = vunpack.c.l.b16 %v75
    %v108 = vunpack.c.l.b16 %v76
    %v109 = vunpack.c.l.b16 %v77
    %v110 = vunpack.c.l.b16 %v78
    %v111 = vunpack.c.l.b16 %v79
    %v112 = vunpack.c.l.b16 %v80
    %v113 = vunpack.c.l.b16 %v81
    %v114 = vunpack.c.l.b16 %v82
    %v115 = vunpack.c.l.b16 %v83
    %v116 = vunpack.c.l.b16 %v84
    %v117 = vpack.c.b16 %v102, %v101
    %v118 = vpack.c.b16 %v104, %v103
    %v119 = vpack.c.b16 %v106, %v105
    %v120 = vpack.c.b16 %v108, %v107
    %v121 = vpack.c.b16 %v110, %v109
    %v122 = vpack.c.b16 %v112, %v111
    %v123 = vpack.c.b16 %v114, %v113
    %v124 = vpack.c.b16 %v116, %v115
    %133 = vmatprep.subr.bf16.mxu0 0
    %134 = vmatpush1.bf16.xpose.msra.mxu0 %v117
    %135 = vmatprep.subr.bf16.mxu0 0
    %136 = vmatpush1.bf16.xpose.msra.mxu0 %v118
    %137 = vmatprep.subr.bf16.mxu0 0
    %138 = vmatpush1.bf16.xpose.msra.mxu0 %v119
    %139 = vmatprep.subr.bf16.mxu0 0
    %140 = vmatpush1.bf16.xpose.msra.mxu0 %v120
    %141 = vmatprep.subr.bf16.mxu0 0
    %142 = vmatpush1.bf16.xpose.msra.mxu0 %v121
    %143 = vmatprep.subr.bf16.mxu0 0
    %144 = vmatpush1.bf16.xpose.msra.mxu0 %v122
    %145 = vmatprep.subr.bf16.mxu0 0
    %146 = vmatpush1.bf16.xpose.msra.mxu0 %v123
    %147 = vmatprep.subr.bf16.mxu0 0
    %148 = vmatpush1.bf16.xpose.msra.mxu0 %v124
    %149 = vmatprep.subr.bf16.mxu0 0
    %150 = vmatpush1.bf16.xpose.msra.mxu0 0
    %151 = vmatprep.subr.bf16.mxu0 0
    %152 = vmatpush1.bf16.xpose.msra.mxu0 0
    %153 = vmatprep.subr.bf16.mxu0 0
    %154 = vmatpush1.bf16.xpose.msra.mxu0 0
    %155 = vmatprep.subr.bf16.mxu0 0
    %156 = vmatpush1.bf16.xpose.msra.mxu0 0
    %157 = vmatprep.subr.bf16.mxu0 0
    %158 = vmatpush1.bf16.xpose.msra.mxu0 0
    %159 = vmatprep.subr.bf16.mxu0 0
    %160 = vmatpush1.bf16.xpose.msra.mxu0 0
    %161 = vmatprep.subr.bf16.mxu0 0
    %162 = vmatpush1.bf16.xpose.msra.mxu0 0
    %163 = vmatprep.subr.bf16.mxu0 0
    %164 = vmatpush1.bf16.xpose.msra.mxu0 0
    %165 = vmatprep.mubr.bf16.mxu0 0
    %166 = vmatmul.mubr.bf16.gmra.mrb[0].mxu0 %v68
    %v167 = vpop.f32.mrb[0].mxu0
    %v168 = vadd.f32 0.0, %v167
    %v169 = vpop.f32.mrb[0].mxu0
    %v170 = vpop.f32.mrb[0].mxu0
    %v171 = vpop.f32.mrb[0].mxu0
    %172 = vdwg.mxu0
    %v173 = vlaneseq
    %v174 = vand.u32 %v173, 127
    %vm175 = vcmp.lt.s32.totalorder %v174, 8
    %v176 = vsel %vm175, %v168, -1e+30
    %177 = vmax.xlane.f32.xlu0 %v176
    %v178 = vpop.xlane.xlu0 %177
    %vm179 = vcmp.eq.f32.partialorder %v176, %v178
    %v180 = vsel %vm179, %v174, 128
    %v181 = vand.u32 %v180, 65535
    %v182 = vshra.s32 %v180, 16
    %v183 = vcvt.s32.f32 %v181
    %v184 = vcvt.s32.f32 %v182
    %185 = vmin.xlane.f32.xlu0 %v184
    %v186 = vpop.xlane.xlu0 %185
    %vm187 = vcmp.eq.f32.partialorder %v184, %v186
    %v188 = vsel %vm187, %v183, inf
    %189 = vmin.xlane.f32.xlu0 %v188
    %v190 = vpop.xlane.xlu0 %189
    %v191 = vcvt.f32.s32 %v190
    %v192 = vcvt.f32.s32 %v186
    %v193 = vshll.u32 %v192, 16
    %v194 = vadd.s32 %v193, %v191
    %vm195 = vcmp.eq.s32.totalorder %v174, %v194
    %v196 = vsel %vm195, 1, 0
    %v197 = vcvt.s32.f32 %v196
    %v198 = vpack.c.bf16 %v197, %v197
    %v199 = vld [vmem:[#allocation4] sm:$0xf]
    %v200 = vld [vmem:[#allocation4 + $0x4] sm:$0xf]
    %v201 = vld [vmem:[#allocation4 + $0x8] sm:$0xf]
    %v202 = vld [vmem:[#allocation4 + $0xc] sm:$0xf]
    %v203 = vld [vmem:[#allocation4 + $0x10] sm:$0xf]
    %v204 = vld [vmem:[#allocation4 + $0x14] sm:$0xf]
    %v205 = vld [vmem:[#allocation4 + $0x18] sm:$0xf]
    %v206 = vld [vmem:[#allocation4 + $0x1c] sm:$0xf]
    %v207 = vld [vmem:[#allocation4 + $0x20] sm:$0xf]
    %v208 = vld [vmem:[#allocation4 + $0x24] sm:$0xf]
    %v209 = vld [vmem:[#allocation4 + $0x28] sm:$0xf]
    %v210 = vld [vmem:[#allocation4 + $0x2c] sm:$0xf]
    %v211 = vld [vmem:[#allocation4 + $0x30] sm:$0xf]
    %v212 = vld [vmem:[#allocation4 + $0x34] sm:$0xf]
    %v213 = vld [vmem:[#allocation4 + $0x38] sm:$0xf]
    %v214 = vld [vmem:[#allocation4 + $0x3c] sm:$0xf]
    %v231 = vunpack.c.l.b16 %v199
    %v232 = vunpack.c.l.b16 %v200
    %v233 = vunpack.c.l.b16 %v201
    %v234 = vunpack.c.l.b16 %v202
    %v235 = vunpack.c.l.b16 %v203
    %v236 = vunpack.c.l.b16 %v204
    %v237 = vunpack.c.l.b16 %v205
    %v238 = vunpack.c.l.b16 %v206
    %v239 = vunpack.c.l.b16 %v207
    %v240 = vunpack.c.l.b16 %v208
    %v241 = vunpack.c.l.b16 %v209
    %v242 = vunpack.c.l.b16 %v210
    %v243 = vunpack.c.l.b16 %v211
    %v244 = vunpack.c.l.b16 %v212
    %v245 = vunpack.c.l.b16 %v213
    %v246 = vunpack.c.l.b16 %v214
    %v247 = vpack.c.b16 %v232, %v231
    %v248 = vpack.c.b16 %v234, %v233
    %v249 = vpack.c.b16 %v236, %v235
    %v250 = vpack.c.b16 %v238, %v237
    %v251 = vpack.c.b16 %v240, %v239
    %v252 = vpack.c.b16 %v242, %v241
    %v253 = vpack.c.b16 %v244, %v243
    %v254 = vpack.c.b16 %v246, %v245
    %263 = vmatprep.subr.bf16.mxu0 0
    %264 = vmatpush1.bf16.msra.mxu0 %v247
    %265 = vmatprep.subr.bf16.mxu0 0
    %266 = vmatpush1.bf16.msra.mxu0 %v248
    %267 = vmatprep.subr.bf16.mxu0 0
    %268 = vmatpush1.bf16.msra.mxu0 %v249
    %269 = vmatprep.subr.bf16.mxu0 0
    %270 = vmatpush1.bf16.msra.mxu0 %v250
    %271 = vmatprep.subr.bf16.mxu0 0
    %272 = vmatpush1.bf16.msra.mxu0 %v251
    %273 = vmatprep.subr.bf16.mxu0 0
    %274 = vmatpush1.bf16.msra.mxu0 %v252
    %275 = vmatprep.subr.bf16.mxu0 0
    %276 = vmatpush1.bf16.msra.mxu0 %v253
    %277 = vmatprep.subr.bf16.mxu0 0
    %278 = vmatpush1.bf16.msra.mxu0 %v254
    %279 = vmatprep.subr.bf16.mxu0 0
    %280 = vmatpush1.bf16.msra.mxu0 0
    %281 = vmatprep.subr.bf16.mxu0 0
    %282 = vmatpush1.bf16.msra.mxu0 0
    %283 = vmatprep.subr.bf16.mxu0 0
    %284 = vmatpush1.bf16.msra.mxu0 0
    %285 = vmatprep.subr.bf16.mxu0 0
    %286 = vmatpush1.bf16.msra.mxu0 0
    %287 = vmatprep.subr.bf16.mxu0 0
    %288 = vmatpush1.bf16.msra.mxu0 0
    %289 = vmatprep.subr.bf16.mxu0 0
    %290 = vmatpush1.bf16.msra.mxu0 0
    %291 = vmatprep.subr.bf16.mxu0 0
    %292 = vmatpush1.bf16.msra.mxu0 0
    %293 = vmatprep.subr.bf16.mxu0 0
    %294 = vmatpush1.bf16.msra.mxu0 0
    %295 = vmatprep.mubr.bf16.mxu0 0
    %296 = vmatmul.mubr.bf16.gmra.mrb[0].mxu0 %v198
    %v297 = vpop.f32.mrb[0].mxu0
    %v298 = vadd.f32 0.0, %v297
    %v299 = vpop.f32.mrb[0].mxu0
    %v300 = vpop.f32.mrb[0].mxu0
    %v301 = vpop.f32.mrb[0].mxu0
    %302 = vdwg.mxu0
    %v303 = vpack.c.bf16 %v298, %v298
    %304 = vst [vmem:[%s4] sm:$0xf] %v303
    %v305 = vld [vmem:[#allocation6] sm:$0xf]
    %v306 = vld [vmem:[#allocation6 + $0x4] sm:$0xf]
    %v307 = vld [vmem:[#allocation6 + $0x8] sm:$0xf]
    %v308 = vld [vmem:[#allocation6 + $0xc] sm:$0xf]
    %v309 = vld [vmem:[#allocation6 + $0x10] sm:$0xf]
    %v310 = vld [vmem:[#allocation6 + $0x14] sm:$0xf]
    %v311 = vld [vmem:[#allocation6 + $0x18] sm:$0xf]
    %v312 = vld [vmem:[#allocation6 + $0x1c] sm:$0xf]
    %v313 = vld [vmem:[#allocation6 + $0x20] sm:$0xf]
    %v314 = vld [vmem:[#allocation6 + $0x24] sm:$0xf]
    %v315 = vld [vmem:[#allocation6 + $0x28] sm:$0xf]
    %v316 = vld [vmem:[#allocation6 + $0x2c] sm:$0xf]
    %v317 = vld [vmem:[#allocation6 + $0x30] sm:$0xf]
    %v318 = vld [vmem:[#allocation6 + $0x34] sm:$0xf]
    %v319 = vld [vmem:[#allocation6 + $0x38] sm:$0xf]
    %v320 = vld [vmem:[#allocation6 + $0x3c] sm:$0xf]
    %v337 = vunpack.c.l.b16 %v305
    %v338 = vunpack.c.l.b16 %v306
    %v339 = vunpack.c.l.b16 %v307
    %v340 = vunpack.c.l.b16 %v308
    %v341 = vunpack.c.l.b16 %v309
    %v342 = vunpack.c.l.b16 %v310
    %v343 = vunpack.c.l.b16 %v311
    %v344 = vunpack.c.l.b16 %v312
    %v345 = vunpack.c.l.b16 %v313
    %v346 = vunpack.c.l.b16 %v314
    %v347 = vunpack.c.l.b16 %v315
    %v348 = vunpack.c.l.b16 %v316
    %v349 = vunpack.c.l.b16 %v317
    %v350 = vunpack.c.l.b16 %v318
    %v351 = vunpack.c.l.b16 %v319
    %v352 = vunpack.c.l.b16 %v320
    %v353 = vpack.c.b16 %v338, %v337
    %v354 = vpack.c.b16 %v340, %v339
    %v355 = vpack.c.b16 %v342, %v341
    %v356 = vpack.c.b16 %v344, %v343
    %v357 = vpack.c.b16 %v346, %v345
    %v358 = vpack.c.b16 %v348, %v347
    %v359 = vpack.c.b16 %v350, %v349
    %v360 = vpack.c.b16 %v352, %v351
    %369 = vmatprep.subr.bf16.mxu0 0
    %370 = vmatpush1.bf16.msra.mxu0 %v353
    %371 = vmatprep.subr.bf16.mxu0 0
    %372 = vmatpush1.bf16.msra.mxu0 %v354
    %373 = vmatprep.subr.bf16.mxu0 0
    %374 = vmatpush1.bf16.msra.mxu0 %v355
    %375 = vmatprep.subr.bf16.mxu0 0
    %376 = vmatpush1.bf16.msra.mxu0 %v356
    %377 = vmatprep.subr.bf16.mxu0 0
    %378 = vmatpush1.bf16.msra.mxu0 %v357
    %379 = vmatprep.subr.bf16.mxu0 0
    %380 = vmatpush1.bf16.msra.mxu0 %v358
    %381 = vmatprep.subr.bf16.mxu0 0
    %382 = vmatpush1.bf16.msra.mxu0 %v359
    %383 = vmatprep.subr.bf16.mxu0 0
    %384 = vmatpush1.bf16.msra.mxu0 %v360
    %385 = vmatprep.subr.bf16.mxu0 0
    %386 = vmatpush1.bf16.msra.mxu0 0
    %387 = vmatprep.subr.bf16.mxu0 0
    %388 = vmatpush1.bf16.msra.mxu0 0
    %389 = vmatprep.subr.bf16.mxu0 0
    %390 = vmatpush1.bf16.msra.mxu0 0
    %391 = vmatprep.subr.bf16.mxu0 0
    %392 = vmatpush1.bf16.msra.mxu0 0
    %393 = vmatprep.subr.bf16.mxu0 0
    %394 = vmatpush1.bf16.msra.mxu0 0
    %395 = vmatprep.subr.bf16.mxu0 0
    %396 = vmatpush1.bf16.msra.mxu0 0
    %397 = vmatprep.subr.bf16.mxu0 0
    %398 = vmatpush1.bf16.msra.mxu0 0
    %399 = vmatprep.subr.bf16.mxu0 0
    %400 = vmatpush1.bf16.msra.mxu0 0
    %401 = vmatprep.mubr.bf16.mxu0 0
    %402 = vmatmul.mubr.bf16.gmra.mrb[0].mxu0 %v198
    %v403 = vpop.f32.mrb[0].mxu0
    %v404 = vadd.f32 0.0, %v403
    %v405 = vpop.f32.mrb[0].mxu0
    %v406 = vpop.f32.mrb[0].mxu0
    %v407 = vpop.f32.mrb[0].mxu0
    %408 = vdwg.mxu0
    %v409 = vpack.c.bf16 %v404, %v404
    %410 = vst [vmem:[%s5] sm:$0xf] %v409
    // Predicated region
    $region30: #{_e_select_eval.1} parent=1 // pred_check
      _
    $region31: #{_e_select_eval.1} parent=1 // pred_check_branch
      %412 = sbr.rel (0) target = $region33
    $region32: #{_e_select_eval.1} parent=1 // pred_region
      _
    $region33: #{_e_select_eval.1} parent=1 // pred_fallthru
      _
    // Predicated region
    $region34: #{_e_select_eval.1} parent=1 // pred_check
      _
    $region35: #{_e_select_eval.1} parent=1 // pred_check_branch
      %414 = sbr.rel (0) target = $region37
    $region36: #{_e_select_eval.1} parent=1 // pred_region
      _
    $region37: #{_e_select_eval.1} parent=1 // pred_fallthru
      _
    // Predicated region
    $region38: #{_e_select_eval.1} parent=1 // pred_check
      _
    $region39: #{_e_select_eval.1} parent=1 // pred_check_branch
      %416 = sbr.rel (0) target = $region41
    $region40: #{_e_select_eval.1} parent=1 // pred_region
      _
    $region41: #{_e_select_eval.1} parent=1 // pred_fallthru
      _
    // Predicated region
    $region42: #{_e_select_eval.1} parent=1 // pred_check
      _
    $region43: #{_e_select_eval.1} parent=1 // pred_check_branch
      %418 = sbr.rel (0) target = $region45
    $region44: #{_e_select_eval.1} parent=1 // pred_region
      _
    $region45: #{_e_select_eval.1} parent=1 // pred_fallthru
      _
    %419 = vsyncpa [#allocation3], 1
    %420 = vsyncpa [#allocation5], 1

</llo_original>
